<compile_context>
chip_gen: v6e
topology: v6e:2x2x1
jax: 0.10.0
libtpu: 0.0.40
codegen_flags: <defaults>
</compile_context>

<pallas_src>
import jax
import jax.numpy as jnp
from jax.experimental import pallas as pl
from jax.experimental.pallas import tpu as pltpu

HIDDEN = 512  # `w1` in the PyTorch module


def _round_up(n, m):
    return (n + m - 1) // m * m


def _mlp_kernel(x_ref, w1_ref, b1_ref, w2_ref, b2_ref, w3_ref, b3_ref,
                o_ref, h1_ref, h2_ref):
    # x_ref: (TB, K_PAD) bf16; w*: bf16; b*: f32; o_ref: (TB, N_PAD) f32.
    # bf16 operands feed the MXU at native rate; accumulation in f32.
    h1 = jnp.dot(x_ref[...], w1_ref[...], preferred_element_type=jnp.float32)
    h1 = jnp.maximum(h1 + b1_ref[...], 0.0)          # bias + ReLU in f32 (VPU)
    h1_ref[...] = h1.astype(h1_ref.dtype)            # stage via VMEM scratch (bf16)

    h2 = jnp.dot(h1_ref[...], w2_ref[...], preferred_element_type=jnp.float32)
    h2 = jnp.maximum(h2 + b2_ref[...], 0.0)
    h2_ref[...] = h2.astype(h2_ref.dtype)

    y = jnp.dot(h2_ref[...], w3_ref[...], preferred_element_type=jnp.float32)
    o_ref[...] = (y + b3_ref[...]).astype(o_ref.dtype)


@jax.jit
def neural_network1_forward(x, params):
    """x: (B, input_dim) float32. params: dict of w1,b1,w2,b2,w3,b3 (f32, (in,out) layout)."""
    w1, b1 = params["w1"], params["b1"]
    w2, b2 = params["w2"], params["b2"]
    w3, b3 = params["w3"], params["b3"]

    B, in_dim = x.shape
    out_dim = w3.shape[1]

    # Lane-pad the narrow feature dims to 128 so loads/stores are lane-dense.
    K_PAD = _round_up(in_dim, 128)
    N_PAD = _round_up(out_dim, 128)

    # Batch tile: MXU-aligned for large batches, sublane-rounded for tiny ones.
    TB = 128 if B >= 128 else _round_up(B, 8)
    B_PAD = _round_up(B, TB)

    # Zero-padding K rows of w1 / N cols of w3+b3 keeps the math identical;
    # padded batch rows and padded output columns are sliced off below.
    # (In production the weight padding/casting would be done once at init.)
    x_p = jnp.pad(x, ((0, B_PAD - B), (0, K_PAD - in_dim))).astype(jnp.bfloat16)
    w1_p = jnp.pad(w1, ((0, K_PAD - in_dim), (0, 0))).astype(jnp.bfloat16)
    w2_p = w2.astype(jnp.bfloat16)
    w3_p = jnp.pad(w3, ((0, 0), (0, N_PAD - out_dim))).astype(jnp.bfloat16)
    b1_p = b1.astype(jnp.float32)
    b2_p = b2.astype(jnp.float32)
    b3_p = jnp.pad(b3, ((0, 0), (0, N_PAD - out_dim))).astype(jnp.float32)

    grid = (pl.cdiv(B_PAD, TB),)

    batch_spec = lambda shape: pl.BlockSpec(shape, lambda i: (i, 0))   # tiled over batch
    resident = lambda shape: pl.BlockSpec(shape, lambda i: (0, 0))     # same block every step

    flops = 2 * B_PAD * (K_PAD * HIDDEN + HIDDEN * HIDDEN + HIDDEN * N_PAD)
    bytes_accessed = (
        x_p.size * 2 + w1_p.size * 2 + w2_p.size * 2 + w3_p.size * 2
        + (b1_p.size + b2_p.size + b3_p.size) * 4
        + B_PAD * N_PAD * 4
    )

    out = pl.pallas_call(
        _mlp_kernel,
        out_shape=jax.ShapeDtypeStruct((B_PAD, N_PAD), jnp.float32),
        grid=grid,
        in_specs=[
            batch_spec((TB, K_PAD)),
            resident((K_PAD, HIDDEN)), resident((1, HIDDEN)),
            resident((HIDDEN, HIDDEN)), resident((1, HIDDEN)),
            resident((HIDDEN, N_PAD)), resident((1, N_PAD)),
        ],
        out_specs=batch_spec((TB, N_PAD)),
        scratch_shapes=[
            pltpu.VMEM((TB, HIDDEN), jnp.bfloat16),   # h1 staging
            pltpu.VMEM((TB, HIDDEN), jnp.bfloat16),   # h2 staging
        ],
        compiler_params=pltpu.CompilerParams(
            dimension_semantics=("parallel",),         # shard batch tiles across TCs (v7x)
            vmem_limit_bytes=32 * 1024 * 1024,         # explicit budget; usage is ~2-3 MiB
        ),
        cost_estimate=pl.CostEstimate(
            flops=flops, transcendentals=0, bytes_accessed=bytes_accessed),
    )(x_p, w1_p, b1_p, w2_p, b2_p, w3_p, b3_p)

    return out[:B, :out_dim]


def init_params(key, input_dim, output_dim):
    """Deterministic init matching nn.Linear shapes (weights stored as (in, out))."""
    ks = jax.random.split(key, 6)

    def linear(kw, kb, fan_in, fan_out):
        bound = 1.0 / jnp.sqrt(fan_in)
        w = jax.random.uniform(kw, (fan_in, fan_out), jnp.float32, -bound, bound)
        b = jax.random.uniform(kb, (1, fan_out), jnp.float32, -bound, bound)
        return w, b

    w1, b1 = linear(ks[0], ks[1], input_dim, HIDDEN)
    w2, b2 = linear(ks[2], ks[3], HIDDEN, HIDDEN)
    w3, b3 = linear(ks[4], ks[5], HIDDEN, output_dim)
    return {"w1": w1, "b1": b1, "w2": w2, "b2": b2, "w3": w3, "b3": b3}


def _reference_f32(x, p):
    h1 = jnp.maximum(x @ p["w1"] + p["b1"], 0.0)
    h2 = jnp.maximum(h1 @ p["w2"] + p["b2"], 0.0)
    return h2 @ p["w3"] + p["b3"]


def _reference_bf16(x, p):
    # Mirrors the kernel numerics: bf16 MXU inputs, f32 accumulation,
    # f32 bias/ReLU, bf16 activation staging.
    bf = jnp.bfloat16
    h1 = jnp.dot(x.astype(bf), p["w1"].astype(bf), preferred_element_type=jnp.float32)
    h1 = jnp.maximum(h1 + p["b1"], 0.0).astype(bf)
    h2 = jnp.dot(h1, p["w2"].astype(bf), preferred_element_type=jnp.float32)
    h2 = jnp.maximum(h2 + p["b2"], 0.0).astype(bf)
    y = jnp.dot(h2, p["w3"].astype(bf), preferred_element_type=jnp.float32)
    return y + p["b3"]


if __name__ == "__main__":
    key = jax.random.PRNGKey(0)
    k_x, k_p = jax.random.split(key)

    batch, input_dim, output_dim = 8, 32, 16
    x = jax.random.normal(k_x, (batch, input_dim), jnp.float32)
    params = init_params(k_p, input_dim, output_dim)

    y = neural_network1_forward(x, params)
    y = jax.block_until_ready(y)
    assert y.shape == (batch, output_dim)

    # Exact-path check (same bf16/f32 mixed precision as the kernel).
    y_bf = _reference_bf16(x, params)
    assert jnp.allclose(y, y_bf, atol=1e-3, rtol=1e-3), float(jnp.max(jnp.abs(y - y_bf)))

    # Semantics check against the pure-f32 PyTorch-equivalent forward
    # (loose tolerance accounts for the bf16 weight/activation quantization).
    y_f32 = _reference_f32(x, params)
    assert jnp.allclose(y, y_f32, atol=5e-2, rtol=5e-2), float(jnp.max(jnp.abs(y - y_f32)))

    print("KERNEL_OK")
</pallas_src>

<mosaic_0001>
module attributes {stable_mosaic.version = 11 : i64} {
  func.func @_mlp_kernel(%arg0: i32, %arg1: memref<8x128xbf16, #tpu.memory_space<vmem>>, %arg2: memref<128x512xbf16, #tpu.memory_space<vmem>>, %arg3: memref<1x512xf32, #tpu.memory_space<vmem>>, %arg4: memref<512x512xbf16, #tpu.memory_space<vmem>>, %arg5: memref<1x512xf32, #tpu.memory_space<vmem>>, %arg6: memref<512x128xbf16, #tpu.memory_space<vmem>>, %arg7: memref<1x128xf32, #tpu.memory_space<vmem>>, %arg8: memref<8x128xf32, #tpu.memory_space<vmem>>, %arg9: memref<8x512xbf16, #tpu.memory_space<vmem>>, %arg10: memref<8x512xbf16, #tpu.memory_space<vmem>>) attributes {dimension_semantics = [#tpu.dimension_semantics<parallel>], iteration_bounds = array<i64: 1>, scalar_prefetch = 0 : i64, scratch_operands = 2 : i64, tpu.core_type = #tpu.core_type<tc>, window_params = [{transform_indices = @transform_0, window_bounds = array<i64: 8, 128>}, {pipeline_mode = #tpu.pipeline_mode<synchronous>, transform_indices = @transform_1, window_bounds = array<i64: 128, 512>}, {pipeline_mode = #tpu.pipeline_mode<synchronous>, transform_indices = @transform_2, window_bounds = array<i64: 1, 512>}, {pipeline_mode = #tpu.pipeline_mode<synchronous>, transform_indices = @transform_3, window_bounds = array<i64: 512, 512>}, {pipeline_mode = #tpu.pipeline_mode<synchronous>, transform_indices = @transform_4, window_bounds = array<i64: 1, 512>}, {pipeline_mode = #tpu.pipeline_mode<synchronous>, transform_indices = @transform_5, window_bounds = array<i64: 512, 128>}, {pipeline_mode = #tpu.pipeline_mode<synchronous>, transform_indices = @transform_6, window_bounds = array<i64: 1, 128>}, {transform_indices = @transform_7, window_bounds = array<i64: 8, 128>}]} {
    %c0 = arith.constant 0 : index
    %c0_0 = arith.constant 0 : index
    %0 = vector.load %arg1[%c0, %c0_0] : memref<8x128xbf16, #tpu.memory_space<vmem>>, vector<8x128xbf16>
    %c0_1 = arith.constant 0 : index
    %c0_2 = arith.constant 0 : index
    %1 = vector.load %arg2[%c0_1, %c0_2] : memref<128x512xbf16, #tpu.memory_space<vmem>>, vector<128x512xbf16>
    %cst = arith.constant dense<0.000000e+00> : vector<8x512xf32>
    %2 = tpu.matmul %0, %1, %cst {dimension_numbers = #tpu.dot_dimension_numbers<[1], [0], [0], [1], [0, 0, 1, 1], [], []>} : vector<8x128xbf16>, vector<128x512xbf16>, vector<8x512xf32> -> vector<8x512xf32>
    %c0_3 = arith.constant 0 : index
    %c0_4 = arith.constant 0 : index
    %3 = vector.load %arg3[%c0_3, %c0_4] : memref<1x512xf32, #tpu.memory_space<vmem>>, vector<1x512xf32>
    %4 = vector.broadcast %3 : vector<1x512xf32> to vector<8x512xf32>
    %5 = arith.addf %2, %4 : vector<8x512xf32>
    %cst_5 = arith.constant 0.000000e+00 : f32
    %6 = vector.broadcast %cst_5 : f32 to vector<8x512xf32>
    %7 = arith.maximumf %5, %6 : vector<8x512xf32>
    %8 = arith.truncf %7 : vector<8x512xf32> to vector<8x512xbf16>
    %c0_6 = arith.constant 0 : index
    %c0_7 = arith.constant 0 : index
    %9 = vector.load %arg9[%c0_6, %c0_7] : memref<8x512xbf16, #tpu.memory_space<vmem>>, vector<8x512xbf16>
    tpu.vector_store %arg9[%c0_6, %c0_7], %8 {strides = array<i32>} : memref<8x512xbf16, #tpu.memory_space<vmem>>, vector<8x512xbf16>,
    %c0_8 = arith.constant 0 : index
    %c0_9 = arith.constant 0 : index
    %10 = vector.load %arg9[%c0_8, %c0_9] : memref<8x512xbf16, #tpu.memory_space<vmem>>, vector<8x512xbf16>
    %c0_10 = arith.constant 0 : index
    %c0_11 = arith.constant 0 : index
    %11 = vector.load %arg4[%c0_10, %c0_11] : memref<512x512xbf16, #tpu.memory_space<vmem>>, vector<512x512xbf16>
    %cst_12 = arith.constant dense<0.000000e+00> : vector<8x512xf32>
    %12 = tpu.matmul %10, %11, %cst_12 {dimension_numbers = #tpu.dot_dimension_numbers<[1], [0], [0], [1], [0, 0, 1, 1], [], []>} : vector<8x512xbf16>, vector<512x512xbf16>, vector<8x512xf32> -> vector<8x512xf32>
    %c0_13 = arith.constant 0 : index
    %c0_14 = arith.constant 0 : index
    %13 = vector.load %arg5[%c0_13, %c0_14] : memref<1x512xf32, #tpu.memory_space<vmem>>, vector<1x512xf32>
    %14 = vector.broadcast %13 : vector<1x512xf32> to vector<8x512xf32>
    %15 = arith.addf %12, %14 : vector<8x512xf32>
    %cst_15 = arith.constant 0.000000e+00 : f32
    %16 = vector.broadcast %cst_15 : f32 to vector<8x512xf32>
    %17 = arith.maximumf %15, %16 : vector<8x512xf32>
    %18 = arith.truncf %17 : vector<8x512xf32> to vector<8x512xbf16>
    %c0_16 = arith.constant 0 : index
    %c0_17 = arith.constant 0 : index
    %19 = vector.load %arg10[%c0_16, %c0_17] : memref<8x512xbf16, #tpu.memory_space<vmem>>, vector<8x512xbf16>
    tpu.vector_store %arg10[%c0_16, %c0_17], %18 {strides = array<i32>} : memref<8x512xbf16, #tpu.memory_space<vmem>>, vector<8x512xbf16>,
    %c0_18 = arith.constant 0 : index
    %c0_19 = arith.constant 0 : index
    %20 = vector.load %arg10[%c0_18, %c0_19] : memref<8x512xbf16, #tpu.memory_space<vmem>>, vector<8x512xbf16>
    %c0_20 = arith.constant 0 : index
    %c0_21 = arith.constant 0 : index
    %21 = vector.load %arg6[%c0_20, %c0_21] : memref<512x128xbf16, #tpu.memory_space<vmem>>, vector<512x128xbf16>
    %cst_22 = arith.constant dense<0.000000e+00> : vector<8x128xf32>
    %22 = tpu.matmul %20, %21, %cst_22 {dimension_numbers = #tpu.dot_dimension_numbers<[1], [0], [0], [1], [0, 0, 1, 1], [], []>} : vector<8x512xbf16>, vector<512x128xbf16>, vector<8x128xf32> -> vector<8x128xf32>
    %c0_23 = arith.constant 0 : index
    %c0_24 = arith.constant 0 : index
    %23 = vector.load %arg7[%c0_23, %c0_24] : memref<1x128xf32, #tpu.memory_space<vmem>>, vector<1x128xf32>
    %24 = vector.broadcast %23 : vector<1x128xf32> to vector<8x128xf32>
    %25 = arith.addf %22, %24 : vector<8x128xf32>
    %c0_25 = arith.constant 0 : index
    %c0_26 = arith.constant 0 : index
    %26 = vector.load %arg8[%c0_25, %c0_26] : memref<8x128xf32, #tpu.memory_space<vmem>>, vector<8x128xf32>
    tpu.vector_store %arg8[%c0_25, %c0_26], %25 {strides = array<i32>} : memref<8x128xf32, #tpu.memory_space<vmem>>, vector<8x128xf32>,
    return
  }
  func.func @transform_0(%arg0: i32) -> (i32, i32) {
    %c0_i32 = arith.constant 0 : i32
    %c0_i32_0 = arith.constant 0 : i32
    return %arg0, %c0_i32 : i32, i32
  }
  func.func @transform_1(%arg0: i32) -> (i32, i32) {
    %c0_i32 = arith.constant 0 : i32
    %c0_i32_0 = arith.constant 0 : i32
    %c0_i32_1 = arith.constant 0 : i32
    return %c0_i32, %c0_i32_0 : i32, i32
  }
  func.func @transform_2(%arg0: i32) -> (i32, i32) {
    %c0_i32 = arith.constant 0 : i32
    %c0_i32_0 = arith.constant 0 : i32
    %c0_i32_1 = arith.constant 0 : i32
    return %c0_i32, %c0_i32_0 : i32, i32
  }
  func.func @transform_3(%arg0: i32) -> (i32, i32) {
    %c0_i32 = arith.constant 0 : i32
    %c0_i32_0 = arith.constant 0 : i32
    %c0_i32_1 = arith.constant 0 : i32
    return %c0_i32, %c0_i32_0 : i32, i32
  }
  func.func @transform_4(%arg0: i32) -> (i32, i32) {
    %c0_i32 = arith.constant 0 : i32
    %c0_i32_0 = arith.constant 0 : i32
    %c0_i32_1 = arith.constant 0 : i32
    return %c0_i32, %c0_i32_0 : i32, i32
  }
  func.func @transform_5(%arg0: i32) -> (i32, i32) {
    %c0_i32 = arith.constant 0 : i32
    %c0_i32_0 = arith.constant 0 : i32
    %c0_i32_1 = arith.constant 0 : i32
    return %c0_i32, %c0_i32_0 : i32, i32
  }
  func.func @transform_6(%arg0: i32) -> (i32, i32) {
    %c0_i32 = arith.constant 0 : i32
    %c0_i32_0 = arith.constant 0 : i32
    %c0_i32_1 = arith.constant 0 : i32
    return %c0_i32, %c0_i32_0 : i32, i32
  }
  func.func @transform_7(%arg0: i32) -> (i32, i32) {
    %c0_i32 = arith.constant 0 : i32
    %c0_i32_0 = arith.constant 0 : i32
    return %arg0, %c0_i32 : i32, i32
  }
}

</mosaic_0001>

<llo_original>
// kernel: neural_network1_forward.1
$region0: #{neural_network1_forward.1}
  #allocation0 [shape = 'u32[]', space=smem, size = 0x4, offset = 0x4, fixed_abs, tag = 'smem constant byte address 0x4 - core index']
  #allocation1 [shape = 'u32[144,128]{1,0:T(1,128)}', space=vmem, size = 0x12000, scoped, tag = 'internal scratch']
  #allocation2 [shape = 'bf16[8,512]{1,0:T(8,128)(2,1)}', space=vmem, size = 0x2000, scoped, tag = 'scratch operand']
  #allocation3 [shape = 'bf16[8,512]{1,0:T(8,128)(2,1)}', space=vmem, size = 0x2000, scoped, tag = 'scratch operand']
  %s0 = inlined_call_operand.vmem [shape: bf16[8,128], index: 0, kind: input, shape index: {}]
  %s1 = inlined_call_operand.vmem [shape: bf16[128,512], index: 1, kind: input, shape index: {}]
  %s2 = inlined_call_operand.vmem [shape: f32[1,512], index: 2, kind: input, shape index: {}]
  %s3 = inlined_call_operand.vmem [shape: bf16[512,512], index: 3, kind: input, shape index: {}]
  %s4 = inlined_call_operand.vmem [shape: f32[1,512], index: 4, kind: input, shape index: {}]
  %s5 = inlined_call_operand.vmem [shape: bf16[512,128], index: 5, kind: input, shape index: {}]
  %s6 = inlined_call_operand.vmem [shape: f32[1,128], index: 6, kind: input, shape index: {}]
  %s7 = inlined_call_operand.hbm [shape: f32[8,128], index: 7, kind: output, shape index: {}]
  %s8 = sld [smem:[#allocation0]]
  $region38: #{neural_network1_forward.1} parent=0
    _
  %s10 = ssub.s32 1, %s8
  %s11 = scalar_select 0, %s10, %s8
  $region1: #{neural_network1_forward.1} parent=0
    #allocation4 [shape = 'u8[4096]{0}', space=vmem, size = 0x1000, scoped, tag = 'output window, operand 0, single buffered']
    #allocation5 [shape = 's32[1]{0}', space=sflag, size = 0x4, scoped, tag = 'scoped memory for neural_network1_forward.1']
    %12 = vsyncpa [#allocation5], 0
    // Predicated region
    $region2: #{neural_network1_forward.1} parent=1 // pred_check
      _
    $region3: #{neural_network1_forward.1} parent=1 // pred_check_branch
      %14 = sbr.rel (0) target = $region5
    $region4: #{neural_network1_forward.1} parent=1 // pred_region
      _
    $region5: #{neural_network1_forward.1} parent=1 // pred_fallthru
      _
    // Predicated region
    $region6: #{neural_network1_forward.1} parent=1 // pred_check
      _
    $region7: #{neural_network1_forward.1} parent=1 // pred_check_branch
      %16 = sbr.rel (0) target = $region9
    $region8: #{neural_network1_forward.1} parent=1 // pred_region
      _
    $region9: #{neural_network1_forward.1} parent=1 // pred_fallthru
      _
    // Predicated region
    $region10: #{neural_network1_forward.1} parent=1 // pred_check
      _
    $region11: #{neural_network1_forward.1} parent=1 // pred_check_branch
      %18 = sbr.rel (0) target = $region13
    $region12: #{neural_network1_forward.1} parent=1 // pred_region
      _
    $region13: #{neural_network1_forward.1} parent=1 // pred_fallthru
      _
    // Predicated region
    $region14: #{neural_network1_forward.1} parent=1 // pred_check
      _
    $region15: #{neural_network1_forward.1} parent=1 // pred_check_branch
      %20 = sbr.rel (0) target = $region17
    $region16: #{neural_network1_forward.1} parent=1 // pred_region
      _
    $region17: #{neural_network1_forward.1} parent=1 // pred_fallthru
      _
    // Predicated region
    $region18: #{neural_network1_forward.1} parent=1 // pred_check
      _
    $region19: #{neural_network1_forward.1} parent=1 // pred_check_branch
      %22 = sbr.rel (0) target = $region21
    $region20: #{neural_network1_forward.1} parent=1 // pred_region
      _
    $region21: #{neural_network1_forward.1} parent=1 // pred_fallthru
      _
    // Predicated region
    $region22: #{neural_network1_forward.1} parent=1 // pred_check
      _
    $region23: #{neural_network1_forward.1} parent=1 // pred_check_branch
      %24 = sbr.rel (0) target = $region25
    $region24: #{neural_network1_forward.1} parent=1 // pred_region
      _
    $region25: #{neural_network1_forward.1} parent=1 // pred_fallthru
      _
    // Predicated region
    $region26: #{neural_network1_forward.1} parent=1 // pred_check
      _
    $region27: #{neural_network1_forward.1} parent=1 // pred_check_branch
      %26 = sbr.rel (0) target = $region29
    $region28: #{neural_network1_forward.1} parent=1 // pred_region
      _
    $region29: #{neural_network1_forward.1} parent=1 // pred_fallthru
      _
    %v28 = vld [vmem:[%s0] sm:$0xf]
    %v29 = vld [vmem:[%s1] sm:$0xff]
    %v30 = vld [vmem:[%s1 + $0x8] sm:$0xff]
    %v31 = vld [vmem:[%s1 + $0x10] sm:$0xff]
    %v32 = vld [vmem:[%s1 + $0x18] sm:$0xff]
    %v33 = vld [vmem:[%s1 + $0x20] sm:$0xff]
    %v34 = vld [vmem:[%s1 + $0x28] sm:$0xff]
    %v35 = vld [vmem:[%s1 + $0x30] sm:$0xff]
    %v36 = vld [vmem:[%s1 + $0x38] sm:$0xff]
    %v37 = vld [vmem:[%s1 + $0x40] sm:$0xff]
    %v38 = vld [vmem:[%s1 + $0x48] sm:$0xff]
    %v39 = vld [vmem:[%s1 + $0x50] sm:$0xff]
    %v40 = vld [vmem:[%s1 + $0x58] sm:$0xff]
    %v41 = vld [vmem:[%s1 + $0x60] sm:$0xff]
    %v42 = vld [vmem:[%s1 + $0x68] sm:$0xff]
    %v43 = vld [vmem:[%s1 + $0x70] sm:$0xff]
    %v44 = vld [vmem:[%s1 + $0x78] sm:$0xff]
    %v45 = vld [vmem:[%s1 + $0x80] sm:$0xff]
    %v46 = vld [vmem:[%s1 + $0x88] sm:$0xff]
    %v47 = vld [vmem:[%s1 + $0x90] sm:$0xff]
    %v48 = vld [vmem:[%s1 + $0x98] sm:$0xff]
    %v49 = vld [vmem:[%s1 + $0xa0] sm:$0xff]
    %v50 = vld [vmem:[%s1 + $0xa8] sm:$0xff]
    %v51 = vld [vmem:[%s1 + $0xb0] sm:$0xff]
    %v52 = vld [vmem:[%s1 + $0xb8] sm:$0xff]
    %v53 = vld [vmem:[%s1 + $0xc0] sm:$0xff]
    %v54 = vld [vmem:[%s1 + $0xc8] sm:$0xff]
    %v55 = vld [vmem:[%s1 + $0xd0] sm:$0xff]
    %v56 = vld [vmem:[%s1 + $0xd8] sm:$0xff]
    %v57 = vld [vmem:[%s1 + $0xe0] sm:$0xff]
    %v58 = vld [vmem:[%s1 + $0xe8] sm:$0xff]
    %v59 = vld [vmem:[%s1 + $0xf0] sm:$0xff]
    %v60 = vld [vmem:[%s1 + $0xf8] sm:$0xff]
    %v61 = vld [vmem:[%s2] sm:$0xf]
    %v63 = vlaneseq
    %v64 = vshrl.u32 %v63, 7
    %v65 = vsub.s32 0, %v64
    %v66 = vrot.slane %v61, %v65
    %v67 = vlaneseq
    %v68 = vshrl.u32 %v67, 7
    %v69 = vsub.s32 1, %v68
    %v70 = vrot.slane %v61, %v69
    %v71 = vlaneseq
    %v72 = vshrl.u32 %v71, 7
    %v73 = vsub.s32 2, %v72
    %v74 = vrot.slane %v61, %v73
    %v75 = vlaneseq
    %v76 = vshrl.u32 %v75, 7
    %v77 = vsub.s32 3, %v76
    %v78 = vrot.slane %v61, %v77
    %v115 = vunpack.c.l.b16 %v29
    %v116 = vunpack.c.h.b16 %v29
    %v117 = vunpack.c.l.b16 %v30
    %v118 = vunpack.c.h.b16 %v30
    %v119 = vunpack.c.l.b16 %v31
    %v120 = vunpack.c.h.b16 %v31
    %v121 = vunpack.c.l.b16 %v32
    %v122 = vunpack.c.h.b16 %v32
    %v123 = vunpack.c.l.b16 %v33
    %v124 = vunpack.c.h.b16 %v33
    %v125 = vunpack.c.l.b16 %v34
    %v126 = vunpack.c.h.b16 %v34
    %v127 = vunpack.c.l.b16 %v35
    %v128 = vunpack.c.h.b16 %v35
    %v129 = vunpack.c.l.b16 %v36
    %v130 = vunpack.c.h.b16 %v36
    %v131 = vunpack.c.l.b16 %v37
    %v132 = vunpack.c.h.b16 %v37
    %v133 = vunpack.c.l.b16 %v38
    %v134 = vunpack.c.h.b16 %v38
    %v135 = vunpack.c.l.b16 %v39
    %v136 = vunpack.c.h.b16 %v39
    %v137 = vunpack.c.l.b16 %v40
    %v138 = vunpack.c.h.b16 %v40
    %v139 = vunpack.c.l.b16 %v41
    %v140 = vunpack.c.h.b16 %v41
    %v141 = vunpack.c.l.b16 %v42
    %v142 = vunpack.c.h.b16 %v42
    %v143 = vunpack.c.l.b16 %v43
    %v144 = vunpack.c.h.b16 %v43
    %v145 = vunpack.c.l.b16 %v44
    %v146 = vunpack.c.h.b16 %v44
    %v147 = vunpack.c.l.b16 %v45
    %v148 = vunpack.c.h.b16 %v45
    %v149 = vunpack.c.l.b16 %v46
    %v150 = vunpack.c.h.b16 %v46
    %v151 = vunpack.c.l.b16 %v47
    %v152 = vunpack.c.h.b16 %v47
    %v153 = vunpack.c.l.b16 %v48
    %v154 = vunpack.c.h.b16 %v48
    %v155 = vunpack.c.l.b16 %v49
    %v156 = vunpack.c.h.b16 %v49
    %v157 = vunpack.c.l.b16 %v50
    %v158 = vunpack.c.h.b16 %v50
    %v159 = vunpack.c.l.b16 %v51
    %v160 = vunpack.c.h.b16 %v51
    %v161 = vunpack.c.l.b16 %v52
    %v162 = vunpack.c.h.b16 %v52
    %v163 = vunpack.c.l.b16 %v53
    %v164 = vunpack.c.h.b16 %v53
    %v165 = vunpack.c.l.b16 %v54
    %v166 = vunpack.c.h.b16 %v54
    %v167 = vunpack.c.l.b16 %v55
    %v168 = vunpack.c.h.b16 %v55
    %v169 = vunpack.c.l.b16 %v56
    %v170 = vunpack.c.h.b16 %v56
    %v171 = vunpack.c.l.b16 %v57
    %v172 = vunpack.c.h.b16 %v57
    %v173 = vunpack.c.l.b16 %v58
    %v174 = vunpack.c.h.b16 %v58
    %v175 = vunpack.c.l.b16 %v59
    %v176 = vunpack.c.h.b16 %v59
    %v177 = vunpack.c.l.b16 %v60
    %v178 = vunpack.c.h.b16 %v60
    %v179 = vpack.c.b16 %v119, %v115
    %v180 = vpack.c.b16 %v120, %v116
    %v181 = vpack.c.b16 %v121, %v117
    %v182 = vpack.c.b16 %v122, %v118
    %v183 = vpack.c.b16 %v127, %v123
    %v184 = vpack.c.b16 %v128, %v124
    %v185 = vpack.c.b16 %v129, %v125
    %v186 = vpack.c.b16 %v130, %v126
    %v187 = vpack.c.b16 %v135, %v131
    %v188 = vpack.c.b16 %v136, %v132
    %v189 = vpack.c.b16 %v137, %v133
    %v190 = vpack.c.b16 %v138, %v134
    %v191 = vpack.c.b16 %v143, %v139
    %v192 = vpack.c.b16 %v144, %v140
    %v193 = vpack.c.b16 %v145, %v141
    %v194 = vpack.c.b16 %v146, %v142
    %v195 = vpack.c.b16 %v151, %v147
    %v196 = vpack.c.b16 %v152, %v148
    %v197 = vpack.c.b16 %v153, %v149
    %v198 = vpack.c.b16 %v154, %v150
    %v199 = vpack.c.b16 %v159, %v155
    %v200 = vpack.c.b16 %v160, %v156
    %v201 = vpack.c.b16 %v161, %v157
    %v202 = vpack.c.b16 %v162, %v158
    %v203 = vpack.c.b16 %v167, %v163
    %v204 = vpack.c.b16 %v168, %v164
    %v205 = vpack.c.b16 %v169, %v165
    %v206 = vpack.c.b16 %v170, %v166
    %v207 = vpack.c.b16 %v175, %v171
    %v208 = vpack.c.b16 %v176, %v172
    %v209 = vpack.c.b16 %v177, %v173
    %v210 = vpack.c.b16 %v178, %v174
    %243 = vmatprep.subr.bf16.mxu0 %v208
    %244 = vmatpush1.bf16.msra.mxu0 %v207
    %245 = vmatprep.subr.bf16.mxu0 %v204
    %246 = vmatpush1.bf16.msra.mxu0 %v203
    %247 = vmatprep.subr.bf16.mxu0 %v200
    %248 = vmatpush1.bf16.msra.mxu0 %v199
    %249 = vmatprep.subr.bf16.mxu0 %v196
    %250 = vmatpush1.bf16.msra.mxu0 %v195
    %251 = vmatprep.subr.bf16.mxu0 %v192
    %252 = vmatpush1.bf16.msra.mxu0 %v191
    %253 = vmatprep.subr.bf16.mxu0 %v188
    %254 = vmatpush1.bf16.msra.mxu0 %v187
    %255 = vmatprep.subr.bf16.mxu0 %v184
    %256 = vmatpush1.bf16.msra.mxu0 %v183
    %257 = vmatprep.subr.bf16.mxu0 %v180
    %258 = vmatpush1.bf16.msra.mxu0 %v179
    %259 = vmatprep.subr.bf16.mxu0 0
    %260 = vmatpush2.bf16.msra.mxu0 0
    %261 = vmatprep.subr.bf16.mxu0 0
    %262 = vmatpush2.bf16.msra.mxu0 0
    %263 = vmatprep.subr.bf16.mxu0 0
    %264 = vmatpush2.bf16.msra.mxu0 0
    %265 = vmatprep.subr.bf16.mxu0 0
    %266 = vmatpush2.bf16.msra.mxu0 0
    %267 = vmatprep.subr.bf16.mxu0 0
    %268 = vmatpush2.bf16.msra.mxu0 0
    %269 = vmatprep.subr.bf16.mxu0 0
    %270 = vmatpush2.bf16.msra.mxu0 0
    %271 = vmatprep.subr.bf16.mxu0 0
    %272 = vmatpush2.bf16.msra.mxu0 0
    %273 = vmatprep.subr.bf16.mxu0 0
    %274 = vmatpush2.bf16.msra.mxu0 0
    %275 = vmatprep.mubr.bf16.mxu0 0
    %276 = vmatmul.mubr.bf16.gmra.mxu0 %v28
    %v277 = vpop.f32.mrf.mxu0
    %v278 = vadd.f32 %v66, %v277
    %v279 = vpop.f32.mrf.mxu0
    %v280 = vadd.f32 %v70, %v279
    %v281 = vpop.f32.mrf.mxu0
    %v282 = vpop.f32.mrf.mxu0
    %283 = vdwg.mxu0
    %284 = vmatprep.subr.bf16.mxu0 %v210
    %285 = vmatpush1.bf16.msra.mxu0 %v209
    %286 = vmatprep.subr.bf16.mxu0 %v206
    %287 = vmatpush1.bf16.msra.mxu0 %v205
    %288 = vmatprep.subr.bf16.mxu0 %v202
    %289 = vmatpush1.bf16.msra.mxu0 %v201
    %290 = vmatprep.subr.bf16.mxu0 %v198
    %291 = vmatpush1.bf16.msra.mxu0 %v197
    %292 = vmatprep.subr.bf16.mxu0 %v194
    %293 = vmatpush1.bf16.msra.mxu0 %v193
    %294 = vmatprep.subr.bf16.mxu0 %v190
    %295 = vmatpush1.bf16.msra.mxu0 %v189
    %296 = vmatprep.subr.bf16.mxu0 %v186
    %297 = vmatpush1.bf16.msra.mxu0 %v185
    %298 = vmatprep.subr.bf16.mxu0 %v182
    %299 = vmatpush1.bf16.msra.mxu0 %v181
    %300 = vmatprep.subr.bf16.mxu0 0
    %301 = vmatpush2.bf16.msra.mxu0 0
    %302 = vmatprep.subr.bf16.mxu0 0
    %303 = vmatpush2.bf16.msra.mxu0 0
    %304 = vmatprep.subr.bf16.mxu0 0
    %305 = vmatpush2.bf16.msra.mxu0 0
    %306 = vmatprep.subr.bf16.mxu0 0
    %307 = vmatpush2.bf16.msra.mxu0 0
    %308 = vmatprep.subr.bf16.mxu0 0
    %309 = vmatpush2.bf16.msra.mxu0 0
    %310 = vmatprep.subr.bf16.mxu0 0
    %311 = vmatpush2.bf16.msra.mxu0 0
    %312 = vmatprep.subr.bf16.mxu0 0
    %313 = vmatpush2.bf16.msra.mxu0 0
    %314 = vmatprep.subr.bf16.mxu0 0
    %315 = vmatpush2.bf16.msra.mxu0 0
    %316 = vmatprep.mubr.bf16.mxu0 0
    %317 = vmatmul.mubr.bf16.gmra.mxu0 %v28
    %v318 = vpop.f32.mrf.mxu0
    %v319 = vadd.f32 %v74, %v318
    %v320 = vpop.f32.mrf.mxu0
    %v321 = vadd.f32 %v78, %v320
    %v322 = vpop.f32.mrf.mxu0
    %v323 = vpop.f32.mrf.mxu0
    %324 = vdwg.mxu0
    %v325 = vmax.f32 %v278, 0.0
    %v326 = vmax.f32 %v280, 0.0
    %v327 = vmax.f32 %v319, 0.0
    %v328 = vmax.f32 %v321, 0.0
    %v329 = vpack.c.bf16 %v325, %v325
    %v330 = vpack.c.bf16 %v326, %v326
    %v331 = vpack.c.bf16 %v327, %v327
    %v332 = vpack.c.bf16 %v328, %v328
    %v337 = vunpack.c.l.b16 %v329
    %v338 = vunpack.c.l.b16 %v330
    %v339 = vunpack.c.l.b16 %v331
    %v340 = vunpack.c.l.b16 %v332
    %v341 = vpack.c.b16 %v338, %v337
    %v342 = vpack.c.b16 %v340, %v339
    %345 = vst [vmem:[#allocation2] sm:$0xff] %v341
    %346 = vst [vmem:[#allocation2 + $0x8] sm:$0xff] %v342
    %v347 = vld [vmem:[#allocation2] sm:$0xff]
    %v348 = vld [vmem:[#allocation2 + $0x8] sm:$0xff]
    %v349 = vld [vmem:[%s3] sm:$0xff]
    %v350 = vld [vmem:[%s3 + $0x8] sm:$0xff]
    %v351 = vld [vmem:[%s3 + $0x10] sm:$0xff]
    %v352 = vld [vmem:[%s3 + $0x18] sm:$0xff]
    %v353 = vld [vmem:[%s3 + $0x20] sm:$0xff]
    %v354 = vld [vmem:[%s3 + $0x28] sm:$0xff]
    %v355 = vld [vmem:[%s3 + $0x30] sm:$0xff]
    %v356 = vld [vmem:[%s3 + $0x38] sm:$0xff]
    %v357 = vld [vmem:[%s3 + $0x40] sm:$0xff]
    %v358 = vld [vmem:[%s3 + $0x48] sm:$0xff]
    %v359 = vld [vmem:[%s3 + $0x50] sm:$0xff]
    %v360 = vld [vmem:[%s3 + $0x58] sm:$0xff]
    %v361 = vld [vmem:[%s3 + $0x60] sm:$0xff]
    %v362 = vld [vmem:[%s3 + $0x68] sm:$0xff]
    %v363 = vld [vmem:[%s3 + $0x70] sm:$0xff]
    %v364 = vld [vmem:[%s3 + $0x78] sm:$0xff]
    %v365 = vld [vmem:[%s3 + $0x80] sm:$0xff]
    %v366 = vld [vmem:[%s3 + $0x88] sm:$0xff]
    %v367 = vld [vmem:[%s3 + $0x90] sm:$0xff]
    %v368 = vld [vmem:[%s3 + $0x98] sm:$0xff]
    %v369 = vld [vmem:[%s3 + $0xa0] sm:$0xff]
    %v370 = vld [vmem:[%s3 + $0xa8] sm:$0xff]
    %v371 = vld [vmem:[%s3 + $0xb0] sm:$0xff]
    %v372 = vld [vmem:[%s3 + $0xb8] sm:$0xff]
    %v373 = vld [vmem:[%s3 + $0xc0] sm:$0xff]
    %v374 = vld [vmem:[%s3 + $0xc8] sm:$0xff]
    %v375 = vld [vmem:[%s3 + $0xd0] sm:$0xff]
    %v376 = vld [vmem:[%s3 + $0xd8] sm:$0xff]
    %v377 = vld [vmem:[%s3 + $0xe0] sm:$0xff]
    %v378 = vld [vmem:[%s3 + $0xe8] sm:$0xff]
    %v379 = vld [vmem:[%s3 + $0xf0] sm:$0xff]
    %v380 = vld [vmem:[%s3 + $0xf8] sm:$0xff]
    %v381 = vld [vmem:[%s3 + $0x100] sm:$0xff]
    %v382 = vld [vmem:[%s3 + $0x108] sm:$0xff]
    %v383 = vld [vmem:[%s3 + $0x110] sm:$0xff]
    %v384 = vld [vmem:[%s3 + $0x118] sm:$0xff]
    %v385 = vld [vmem:[%s3 + $0x120] sm:$0xff]
    %v386 = vld [vmem:[%s3 + $0x128] sm:$0xff]
    %v387 = vld [vmem:[%s3 + $0x130] sm:$0xff]
    %v388 = vld [vmem:[%s3 + $0x138] sm:$0xff]
    %v389 = vld [vmem:[%s3 + $0x140] sm:$0xff]
    %v390 = vld [vmem:[%s3 + $0x148] sm:$0xff]
    %v391 = vld [vmem:[%s3 + $0x150] sm:$0xff]
    %v392 = vld [vmem:[%s3 + $0x158] sm:$0xff]
    %v393 = vld [vmem:[%s3 + $0x160] sm:$0xff]
    %v394 = vld [vmem:[%s3 + $0x168] sm:$0xff]
    %v395 = vld [vmem:[%s3 + $0x170] sm:$0xff]
    %v396 = vld [vmem:[%s3 + $0x178] sm:$0xff]
    %v397 = vld [vmem:[%s3 + $0x180] sm:$0xff]
    %v398 = vld [vmem:[%s3 + $0x188] sm:$0xff]
    %v399 = vld [vmem:[%s3 + $0x190] sm:$0xff]
    %v400 = vld [vmem:[%s3 + $0x198] sm:$0xff]
    %v401 = vld [vmem:[%s3 + $0x1a0] sm:$0xff]
    %v402 = vld [vmem:[%s3 + $0x1a8] sm:$0xff]
    %v403 = vld [vmem:[%s3 + $0x1b0] sm:$0xff]
    %v404 = vld [vmem:[%s3 + $0x1b8] sm:$0xff]
    %v405 = vld [vmem:[%s3 + $0x1c0] sm:$0xff]
    %v406 = vld [vmem:[%s3 + $0x1c8] sm:$0xff]
    %v407 = vld [vmem:[%s3 + $0x1d0] sm:$0xff]
    %v408 = vld [vmem:[%s3 + $0x1d8] sm:$0xff]
    %v409 = vld [vmem:[%s3 + $0x1e0] sm:$0xff]
    %v410 = vld [vmem:[%s3 + $0x1e8] sm:$0xff]
    %v411 = vld [vmem:[%s3 + $0x1f0] sm:$0xff]
    %v412 = vld [vmem:[%s3 + $0x1f8] sm:$0xff]
    %v413 = vld [vmem:[%s3 + $0x200] sm:$0xff]
    %v414 = vld [vmem:[%s3 + $0x208] sm:$0xff]
    %v415 = vld [vmem:[%s3 + $0x210] sm:$0xff]
    %v416 = vld [vmem:[%s3 + $0x218] sm:$0xff]
    %v417 = vld [vmem:[%s3 + $0x220] sm:$0xff]
    %v418 = vld [vmem:[%s3 + $0x228] sm:$0xff]
    %v419 = vld [vmem:[%s3 + $0x230] sm:$0xff]
    %v420 = vld [vmem:[%s3 + $0x238] sm:$0xff]
    %v421 = vld [vmem:[%s3 + $0x240] sm:$0xff]
    %v422 = vld [vmem:[%s3 + $0x248] sm:$0xff]
    %v423 = vld [vmem:[%s3 + $0x250] sm:$0xff]
    %v424 = vld [vmem:[%s3 + $0x258] sm:$0xff]
    %v425 = vld [vmem:[%s3 + $0x260] sm:$0xff]
    %v426 = vld [vmem:[%s3 + $0x268] sm:$0xff]
    %v427 = vld [vmem:[%s3 + $0x270] sm:$0xff]
    %v428 = vld [vmem:[%s3 + $0x278] sm:$0xff]
    %v429 = vld [vmem:[%s3 + $0x280] sm:$0xff]
    %v430 = vld [vmem:[%s3 + $0x288] sm:$0xff]
    %v431 = vld [vmem:[%s3 + $0x290] sm:$0xff]
    %v432 = vld [vmem:[%s3 + $0x298] sm:$0xff]
    %v433 = vld [vmem:[%s3 + $0x2a0] sm:$0xff]
    %v434 = vld [vmem:[%s3 + $0x2a8] sm:$0xff]
    %v435 = vld [vmem:[%s3 + $0x2b0] sm:$0xff]
    %v436 = vld [vmem:[%s3 + $0x2b8] sm:$0xff]
    %v437 = vld [vmem:[%s3 + $0x2c0] sm:$0xff]
    %v438 = vld [vmem:[%s3 + $0x2c8] sm:$0xff]
    %v439 = vld [vmem:[%s3 + $0x2d0] sm:$0xff]
    %v440 = vld [vmem:[%s3 + $0x2d8] sm:$0xff]
    %v441 = vld [vmem:[%s3 + $0x2e0] sm:$0xff]
    %v442 = vld [vmem:[%s3 + $0x2e8] sm:$0xff]
    %v443 = vld [vmem:[%s3 + $0x2f0] sm:$0xff]
    %v444 = vld [vmem:[%s3 + $0x2f8] sm:$0xff]
    %v445 = vld [vmem:[%s3 + $0x300] sm:$0xff]
    %v446 = vld [vmem:[%s3 + $0x308] sm:$0xff]
    %v447 = vld [vmem:[%s3 + $0x310] sm:$0xff]
    %v448 = vld [vmem:[%s3 + $0x318] sm:$0xff]
    %v449 = vld [vmem:[%s3 + $0x320] sm:$0xff]
    %v450 = vld [vmem:[%s3 + $0x328] sm:$0xff]
    %v451 = vld [vmem:[%s3 + $0x330] sm:$0xff]
    %v452 = vld [vmem:[%s3 + $0x338] sm:$0xff]
    %v453 = vld [vmem:[%s3 + $0x340] sm:$0xff]
    %v454 = vld [vmem:[%s3 + $0x348] sm:$0xff]
    %v455 = vld [vmem:[%s3 + $0x350] sm:$0xff]
    %v456 = vld [vmem:[%s3 + $0x358] sm:$0xff]
    %v457 = vld [vmem:[%s3 + $0x360] sm:$0xff]
    %v458 = vld [vmem:[%s3 + $0x368] sm:$0xff]
    %v459 = vld [vmem:[%s3 + $0x370] sm:$0xff]
    %v460 = vld [vmem:[%s3 + $0x378] sm:$0xff]
    %v461 = vld [vmem:[%s3 + $0x380] sm:$0xff]
    %v462 = vld [vmem:[%s3 + $0x388] sm:$0xff]
    %v463 = vld [vmem:[%s3 + $0x390] sm:$0xff]
    %v464 = vld [vmem:[%s3 + $0x398] sm:$0xff]
    %v465 = vld [vmem:[%s3 + $0x3a0] sm:$0xff]
    %v466 = vld [vmem:[%s3 + $0x3a8] sm:$0xff]
    %v467 = vld [vmem:[%s3 + $0x3b0] sm:$0xff]
    %v468 = vld [vmem:[%s3 + $0x3b8] sm:$0xff]
    %v469 = vld [vmem:[%s3 + $0x3c0] sm:$0xff]
    %v470 = vld [vmem:[%s3 + $0x3c8] sm:$0xff]
    %v471 = vld [vmem:[%s3 + $0x3d0] sm:$0xff]
    %v472 = vld [vmem:[%s3 + $0x3d8] sm:$0xff]
    %v473 = vld [vmem:[%s3 + $0x3e0] sm:$0xff]
    %v474 = vld [vmem:[%s3 + $0x3e8] sm:$0xff]
    %v475 = vld [vmem:[%s3 + $0x3f0] sm:$0xff]
    %v476 = vld [vmem:[%s3 + $0x3f8] sm:$0xff]
    %v477 = vld [vmem:[%s4] sm:$0xf]
    %v479 = vlaneseq
    %v480 = vshrl.u32 %v479, 7
    %v481 = vsub.s32 0, %v480
    %v482 = vrot.slane %v477, %v481
    %v483 = vlaneseq
    %v484 = vshrl.u32 %v483, 7
    %v485 = vsub.s32 1, %v484
    %v486 = vrot.slane %v477, %v485
    %v487 = vlaneseq
    %v488 = vshrl.u32 %v487, 7
    %v489 = vsub.s32 2, %v488
    %v490 = vrot.slane %v477, %v489
    %v491 = vlaneseq
    %v492 = vshrl.u32 %v491, 7
    %v493 = vsub.s32 3, %v492
    %v494 = vrot.slane %v477, %v493
    %v501 = vunpack.c.l.b16 %v347
    %v502 = vunpack.c.h.b16 %v347
    %v503 = vunpack.c.l.b16 %v348
    %v504 = vunpack.c.h.b16 %v348
    %v505 = vpack.c.b16 %v501, %v501
    %v506 = vpack.c.b16 %v502, %v502
    %v507 = vpack.c.b16 %v503, %v503
    %v508 = vpack.c.b16 %v504, %v504
    %v641 = vunpack.c.l.b16 %v349
    %v642 = vunpack.c.h.b16 %v349
    %v643 = vunpack.c.l.b16 %v350
    %v644 = vunpack.c.h.b16 %v350
    %v645 = vunpack.c.l.b16 %v351
    %v646 = vunpack.c.h.b16 %v351
    %v647 = vunpack.c.l.b16 %v352
    %v648 = vunpack.c.h.b16 %v352
    %v649 = vunpack.c.l.b16 %v353
    %v650 = vunpack.c.h.b16 %v353
    %v651 = vunpack.c.l.b16 %v354
    %v652 = vunpack.c.h.b16 %v354
    %v653 = vunpack.c.l.b16 %v355
    %v654 = vunpack.c.h.b16 %v355
    %v655 = vunpack.c.l.b16 %v356
    %v656 = vunpack.c.h.b16 %v356
    %v657 = vunpack.c.l.b16 %v357
    %v658 = vunpack.c.h.b16 %v357
    %v659 = vunpack.c.l.b16 %v358
    %v660 = vunpack.c.h.b16 %v358
    %v661 = vunpack.c.l.b16 %v359
    %v662 = vunpack.c.h.b16 %v359
    %v663 = vunpack.c.l.b16 %v360
    %v664 = vunpack.c.h.b16 %v360
    %v665 = vunpack.c.l.b16 %v361
    %v666 = vunpack.c.h.b16 %v361
    %v667 = vunpack.c.l.b16 %v362
    %v668 = vunpack.c.h.b16 %v362
    %v669 = vunpack.c.l.b16 %v363
    %v670 = vunpack.c.h.b16 %v363
    %v671 = vunpack.c.l.b16 %v364
    %v672 = vunpack.c.h.b16 %v364
    %v673 = vunpack.c.l.b16 %v365
    %v674 = vunpack.c.h.b16 %v365
    %v675 = vunpack.c.l.b16 %v366
    %v676 = vunpack.c.h.b16 %v366
    %v677 = vunpack.c.l.b16 %v367
    %v678 = vunpack.c.h.b16 %v367
    %v679 = vunpack.c.l.b16 %v368
    %v680 = vunpack.c.h.b16 %v368
    %v681 = vunpack.c.l.b16 %v369
    %v682 = vunpack.c.h.b16 %v369
    %v683 = vunpack.c.l.b16 %v370
    %v684 = vunpack.c.h.b16 %v370
    %v685 = vunpack.c.l.b16 %v371
    %v686 = vunpack.c.h.b16 %v371
    %v687 = vunpack.c.l.b16 %v372
    %v688 = vunpack.c.h.b16 %v372
    %v689 = vunpack.c.l.b16 %v373
    %v690 = vunpack.c.h.b16 %v373
    %v691 = vunpack.c.l.b16 %v374
    %v692 = vunpack.c.h.b16 %v374
    %v693 = vunpack.c.l.b16 %v375
    %v694 = vunpack.c.h.b16 %v375
    %v695 = vunpack.c.l.b16 %v376
    %v696 = vunpack.c.h.b16 %v376
    %v697 = vunpack.c.l.b16 %v377
    %v698 = vunpack.c.h.b16 %v377
    %v699 = vunpack.c.l.b16 %v378
    %v700 = vunpack.c.h.b16 %v378
    %v701 = vunpack.c.l.b16 %v379
    %v702 = vunpack.c.h.b16 %v379
    %v703 = vunpack.c.l.b16 %v380
    %v704 = vunpack.c.h.b16 %v380
    %v705 = vunpack.c.l.b16 %v381
    %v706 = vunpack.c.h.b16 %v381
    %v707 = vunpack.c.l.b16 %v382
    %v708 = vunpack.c.h.b16 %v382
    %v709 = vunpack.c.l.b16 %v383
    %v710 = vunpack.c.h.b16 %v383
    %v711 = vunpack.c.l.b16 %v384
    %v712 = vunpack.c.h.b16 %v384
    %v713 = vunpack.c.l.b16 %v385
    %v714 = vunpack.c.h.b16 %v385
    %v715 = vunpack.c.l.b16 %v386
    %v716 = vunpack.c.h.b16 %v386
    %v717 = vunpack.c.l.b16 %v387
    %v718 = vunpack.c.h.b16 %v387
    %v719 = vunpack.c.l.b16 %v388
    %v720 = vunpack.c.h.b16 %v388
    %v721 = vunpack.c.l.b16 %v389
    %v722 = vunpack.c.h.b16 %v389
    %v723 = vunpack.c.l.b16 %v390
    %v724 = vunpack.c.h.b16 %v390
    %v725 = vunpack.c.l.b16 %v391
    %v726 = vunpack.c.h.b16 %v391
    %v727 = vunpack.c.l.b16 %v392
    %v728 = vunpack.c.h.b16 %v392
    %v729 = vunpack.c.l.b16 %v393
    %v730 = vunpack.c.h.b16 %v393
    %v731 = vunpack.c.l.b16 %v394
    %v732 = vunpack.c.h.b16 %v394
    %v733 = vunpack.c.l.b16 %v395
    %v734 = vunpack.c.h.b16 %v395
    %v735 = vunpack.c.l.b16 %v396
    %v736 = vunpack.c.h.b16 %v396
    %v737 = vunpack.c.l.b16 %v397
    %v738 = vunpack.c.h.b16 %v397
    %v739 = vunpack.c.l.b16 %v398
    %v740 = vunpack.c.h.b16 %v398
    %v741 = vunpack.c.l.b16 %v399
    %v742 = vunpack.c.h.b16 %v399
    %v743 = vunpack.c.l.b16 %v400
    %v744 = vunpack.c.h.b16 %v400
    %v745 = vunpack.c.l.b16 %v401
    %v746 = vunpack.c.h.b16 %v401
    %v747 = vunpack.c.l.b16 %v402
    %v748 = vunpack.c.h.b16 %v402
    %v749 = vunpack.c.l.b16 %v403
    %v750 = vunpack.c.h.b16 %v403
    %v751 = vunpack.c.l.b16 %v404
    %v752 = vunpack.c.h.b16 %v404
    %v753 = vunpack.c.l.b16 %v405
    %v754 = vunpack.c.h.b16 %v405
    %v755 = vunpack.c.l.b16 %v406
    %v756 = vunpack.c.h.b16 %v406
    %v757 = vunpack.c.l.b16 %v407
    %v758 = vunpack.c.h.b16 %v407
    %v759 = vunpack.c.l.b16 %v408
    %v760 = vunpack.c.h.b16 %v408
    %v761 = vunpack.c.l.b16 %v409
    %v762 = vunpack.c.h.b16 %v409
    %v763 = vunpack.c.l.b16 %v410
    %v764 = vunpack.c.h.b16 %v410
    %v765 = vunpack.c.l.b16 %v411
    %v766 = vunpack.c.h.b16 %v411
    %v767 = vunpack.c.l.b16 %v412
    %v768 = vunpack.c.h.b16 %v412
    %v769 = vunpack.c.l.b16 %v413
    %v770 = vunpack.c.h.b16 %v413
    %v771 = vunpack.c.l.b16 %v414
    %v772 = vunpack.c.h.b16 %v414
    %v773 = vunpack.c.l.b16 %v415
    %v774 = vunpack.c.h.b16 %v415
    %v775 = vunpack.c.l.b16 %v416
    %v776 = vunpack.c.h.b16 %v416
    %v777 = vunpack.c.l.b16 %v417
    %v778 = vunpack.c.h.b16 %v417
    %v779 = vunpack.c.l.b16 %v418
    %v780 = vunpack.c.h.b16 %v418
    %v781 = vunpack.c.l.b16 %v419
    %v782 = vunpack.c.h.b16 %v419
    %v783 = vunpack.c.l.b16 %v420
    %v784 = vunpack.c.h.b16 %v420
    %v785 = vunpack.c.l.b16 %v421
    %v786 = vunpack.c.h.b16 %v421
    %v787 = vunpack.c.l.b16 %v422
    %v788 = vunpack.c.h.b16 %v422
    %v789 = vunpack.c.l.b16 %v423
    %v790 = vunpack.c.h.b16 %v423
    %v791 = vunpack.c.l.b16 %v424
    %v792 = vunpack.c.h.b16 %v424
    %v793 = vunpack.c.l.b16 %v425
    %v794 = vunpack.c.h.b16 %v425
    %v795 = vunpack.c.l.b16 %v426
    %v796 = vunpack.c.h.b16 %v426
    %v797 = vunpack.c.l.b16 %v427
    %v798 = vunpack.c.h.b16 %v427
    %v799 = vunpack.c.l.b16 %v428
    %v800 = vunpack.c.h.b16 %v428
    %v801 = vunpack.c.l.b16 %v429
    %v802 = vunpack.c.h.b16 %v429
    %v803 = vunpack.c.l.b16 %v430
    %v804 = vunpack.c.h.b16 %v430
    %v805 = vunpack.c.l.b16 %v431
    %v806 = vunpack.c.h.b16 %v431
    %v807 = vunpack.c.l.b16 %v432
    %v808 = vunpack.c.h.b16 %v432
    %v809 = vunpack.c.l.b16 %v433
    %v810 = vunpack.c.h.b16 %v433
    %v811 = vunpack.c.l.b16 %v434
    %v812 = vunpack.c.h.b16 %v434
    %v813 = vunpack.c.l.b16 %v435
    %v814 = vunpack.c.h.b16 %v435
    %v815 = vunpack.c.l.b16 %v436
    %v816 = vunpack.c.h.b16 %v436
    %v817 = vunpack.c.l.b16 %v437
    %v818 = vunpack.c.h.b16 %v437
    %v819 = vunpack.c.l.b16 %v438
    %v820 = vunpack.c.h.b16 %v438
    %v821 = vunpack.c.l.b16 %v439
    %v822 = vunpack.c.h.b16 %v439
    %v823 = vunpack.c.l.b16 %v440
    %v824 = vunpack.c.h.b16 %v440
    %v825 = vunpack.c.l.b16 %v441
    %v826 = vunpack.c.h.b16 %v441
    %v827 = vunpack.c.l.b16 %v442
    %v828 = vunpack.c.h.b16 %v442
    %v829 = vunpack.c.l.b16 %v443
    %v830 = vunpack.c.h.b16 %v443
    %v831 = vunpack.c.l.b16 %v444
    %v832 = vunpack.c.h.b16 %v444
    %v833 = vunpack.c.l.b16 %v445
    %v834 = vunpack.c.h.b16 %v445
    %v835 = vunpack.c.l.b16 %v446
    %v836 = vunpack.c.h.b16 %v446
    %v837 = vunpack.c.l.b16 %v447
    %v838 = vunpack.c.h.b16 %v447
    %v839 = vunpack.c.l.b16 %v448
    %v840 = vunpack.c.h.b16 %v448
    %v841 = vunpack.c.l.b16 %v449
    %v842 = vunpack.c.h.b16 %v449
    %v843 = vunpack.c.l.b16 %v450
    %v844 = vunpack.c.h.b16 %v450
    %v845 = vunpack.c.l.b16 %v451
    %v846 = vunpack.c.h.b16 %v451
    %v847 = vunpack.c.l.b16 %v452
    %v848 = vunpack.c.h.b16 %v452
    %v849 = vunpack.c.l.b16 %v453
    %v850 = vunpack.c.h.b16 %v453
    %v851 = vunpack.c.l.b16 %v454
    %v852 = vunpack.c.h.b16 %v454
    %v853 = vunpack.c.l.b16 %v455
    %v854 = vunpack.c.h.b16 %v455
    %v855 = vunpack.c.l.b16 %v456
    %v856 = vunpack.c.h.b16 %v456
    %v857 = vunpack.c.l.b16 %v457
    %v858 = vunpack.c.h.b16 %v457
    %v859 = vunpack.c.l.b16 %v458
    %v860 = vunpack.c.h.b16 %v458
    %v861 = vunpack.c.l.b16 %v459
    %v862 = vunpack.c.h.b16 %v459
    %v863 = vunpack.c.l.b16 %v460
    %v864 = vunpack.c.h.b16 %v460
    %v865 = vunpack.c.l.b16 %v461
    %v866 = vunpack.c.h.b16 %v461
    %v867 = vunpack.c.l.b16 %v462
    %v868 = vunpack.c.h.b16 %v462
    %v869 = vunpack.c.l.b16 %v463
    %v870 = vunpack.c.h.b16 %v463
    %v871 = vunpack.c.l.b16 %v464
    %v872 = vunpack.c.h.b16 %v464
    %v873 = vunpack.c.l.b16 %v465
    %v874 = vunpack.c.h.b16 %v465
    %v875 = vunpack.c.l.b16 %v466
    %v876 = vunpack.c.h.b16 %v466
    %v877 = vunpack.c.l.b16 %v467
    %v878 = vunpack.c.h.b16 %v467
    %v879 = vunpack.c.l.b16 %v468
    %v880 = vunpack.c.h.b16 %v468
    %v881 = vunpack.c.l.b16 %v469
    %v882 = vunpack.c.h.b16 %v469
    %v883 = vunpack.c.l.b16 %v470
    %v884 = vunpack.c.h.b16 %v470
    %v885 = vunpack.c.l.b16 %v471
    %v886 = vunpack.c.h.b16 %v471
    %v887 = vunpack.c.l.b16 %v472
    %v888 = vunpack.c.h.b16 %v472
    %v889 = vunpack.c.l.b16 %v473
    %v890 = vunpack.c.h.b16 %v473
    %v891 = vunpack.c.l.b16 %v474
    %v892 = vunpack.c.h.b16 %v474
    %v893 = vunpack.c.l.b16 %v475
    %v894 = vunpack.c.h.b16 %v475
    %v895 = vunpack.c.l.b16 %v476
    %v896 = vunpack.c.h.b16 %v476
    %v897 = vpack.c.b16 %v645, %v641
    %v898 = vpack.c.b16 %v646, %v642
    %v899 = vpack.c.b16 %v647, %v643
    %v900 = vpack.c.b16 %v648, %v644
    %v901 = vpack.c.b16 %v653, %v649
    %v902 = vpack.c.b16 %v654, %v650
    %v903 = vpack.c.b16 %v655, %v651
    %v904 = vpack.c.b16 %v656, %v652
    %v905 = vpack.c.b16 %v661, %v657
    %v906 = vpack.c.b16 %v662, %v658
    %v907 = vpack.c.b16 %v663, %v659
    %v908 = vpack.c.b16 %v664, %v660
    %v909 = vpack.c.b16 %v669, %v665
    %v910 = vpack.c.b16 %v670, %v666
    %v911 = vpack.c.b16 %v671, %v667
    %v912 = vpack.c.b16 %v672, %v668
    %v913 = vpack.c.b16 %v677, %v673
    %v914 = vpack.c.b16 %v678, %v674
    %v915 = vpack.c.b16 %v679, %v675
    %v916 = vpack.c.b16 %v680, %v676
    %v917 = vpack.c.b16 %v685, %v681
    %v918 = vpack.c.b16 %v686, %v682
    %v919 = vpack.c.b16 %v687, %v683
    %v920 = vpack.c.b16 %v688, %v684
    %v921 = vpack.c.b16 %v693, %v689
    %v922 = vpack.c.b16 %v694, %v690
    %v923 = vpack.c.b16 %v695, %v691
    %v924 = vpack.c.b16 %v696, %v692
    %v925 = vpack.c.b16 %v701, %v697
    %v926 = vpack.c.b16 %v702, %v698
    %v927 = vpack.c.b16 %v703, %v699
    %v928 = vpack.c.b16 %v704, %v700
    %v929 = vpack.c.b16 %v709, %v705
    %v930 = vpack.c.b16 %v710, %v706
    %v931 = vpack.c.b16 %v711, %v707
    %v932 = vpack.c.b16 %v712, %v708
    %v933 = vpack.c.b16 %v717, %v713
    %v934 = vpack.c.b16 %v718, %v714
    %v935 = vpack.c.b16 %v719, %v715
    %v936 = vpack.c.b16 %v720, %v716
    %v937 = vpack.c.b16 %v725, %v721
    %v938 = vpack.c.b16 %v726, %v722
    %v939 = vpack.c.b16 %v727, %v723
    %v940 = vpack.c.b16 %v728, %v724
    %v941 = vpack.c.b16 %v733, %v729
    %v942 = vpack.c.b16 %v734, %v730
    %v943 = vpack.c.b16 %v735, %v731
    %v944 = vpack.c.b16 %v736, %v732
    %v945 = vpack.c.b16 %v741, %v737
    %v946 = vpack.c.b16 %v742, %v738
    %v947 = vpack.c.b16 %v743, %v739
    %v948 = vpack.c.b16 %v744, %v740
    %v949 = vpack.c.b16 %v749, %v745
    %v950 = vpack.c.b16 %v750, %v746
    %v951 = vpack.c.b16 %v751, %v747
    %v952 = vpack.c.b16 %v752, %v748
    %v953 = vpack.c.b16 %v757, %v753
    %v954 = vpack.c.b16 %v758, %v754
    %v955 = vpack.c.b16 %v759, %v755
    %v956 = vpack.c.b16 %v760, %v756
    %v957 = vpack.c.b16 %v765, %v761
    %v958 = vpack.c.b16 %v766, %v762
    %v959 = vpack.c.b16 %v767, %v763
    %v960 = vpack.c.b16 %v768, %v764
    %v961 = vpack.c.b16 %v773, %v769
    %v962 = vpack.c.b16 %v774, %v770
    %v963 = vpack.c.b16 %v775, %v771
    %v964 = vpack.c.b16 %v776, %v772
    %v965 = vpack.c.b16 %v781, %v777
    %v966 = vpack.c.b16 %v782, %v778
    %v967 = vpack.c.b16 %v783, %v779
    %v968 = vpack.c.b16 %v784, %v780
    %v969 = vpack.c.b16 %v789, %v785
    %v970 = vpack.c.b16 %v790, %v786
    %v971 = vpack.c.b16 %v791, %v787
    %v972 = vpack.c.b16 %v792, %v788
    %v973 = vpack.c.b16 %v797, %v793
    %v974 = vpack.c.b16 %v798, %v794
    %v975 = vpack.c.b16 %v799, %v795
    %v976 = vpack.c.b16 %v800, %v796
    %v977 = vpack.c.b16 %v805, %v801
    %v978 = vpack.c.b16 %v806, %v802
    %v979 = vpack.c.b16 %v807, %v803
    %v980 = vpack.c.b16 %v808, %v804
    %v981 = vpack.c.b16 %v813, %v809
    %v982 = vpack.c.b16 %v814, %v810
    %v983 = vpack.c.b16 %v815, %v811
    %v984 = vpack.c.b16 %v816, %v812
    %v985 = vpack.c.b16 %v821, %v817
    %v986 = vpack.c.b16 %v822, %v818
    %v987 = vpack.c.b16 %v823, %v819
    %v988 = vpack.c.b16 %v824, %v820
    %v989 = vpack.c.b16 %v829, %v825
    %v990 = vpack.c.b16 %v830, %v826
    %v991 = vpack.c.b16 %v831, %v827
    %v992 = vpack.c.b16 %v832, %v828
    %v993 = vpack.c.b16 %v837, %v833
    %v994 = vpack.c.b16 %v838, %v834
    %v995 = vpack.c.b16 %v839, %v835
    %v996 = vpack.c.b16 %v840, %v836
    %v997 = vpack.c.b16 %v845, %v841
    %v998 = vpack.c.b16 %v846, %v842
    %v999 = vpack.c.b16 %v847, %v843
    %v1000 = vpack.c.b16 %v848, %v844
    %v1001 = vpack.c.b16 %v853, %v849
    %v1002 = vpack.c.b16 %v854, %v850
    %v1003 = vpack.c.b16 %v855, %v851
    %v1004 = vpack.c.b16 %v856, %v852
    %v1005 = vpack.c.b16 %v861, %v857
    %v1006 = vpack.c.b16 %v862, %v858
    %v1007 = vpack.c.b16 %v863, %v859
    %v1008 = vpack.c.b16 %v864, %v860
    %v1009 = vpack.c.b16 %v869, %v865
    %v1010 = vpack.c.b16 %v870, %v866
    %v1011 = vpack.c.b16 %v871, %v867
    %v1012 = vpack.c.b16 %v872, %v868
    %v1013 = vpack.c.b16 %v877, %v873
    %v1014 = vpack.c.b16 %v878, %v874
    %v1015 = vpack.c.b16 %v879, %v875
    %v1016 = vpack.c.b16 %v880, %v876
    %v1017 = vpack.c.b16 %v885, %v881
    %v1018 = vpack.c.b16 %v886, %v882
    %v1019 = vpack.c.b16 %v887, %v883
    %v1020 = vpack.c.b16 %v888, %v884
    %v1021 = vpack.c.b16 %v893, %v889
    %v1022 = vpack.c.b16 %v894, %v890
    %v1023 = vpack.c.b16 %v895, %v891
    %v1024 = vpack.c.b16 %v896, %v892
    %1153 = vmatprep.subr.bf16.mxu0 %v926
    %1154 = vmatpush1.bf16.msra.mxu0 %v925
    %1155 = vmatprep.subr.bf16.mxu0 %v922
    %1156 = vmatpush1.bf16.msra.mxu0 %v921
    %1157 = vmatprep.subr.bf16.mxu0 %v918
    %1158 = vmatpush1.bf16.msra.mxu0 %v917
    %1159 = vmatprep.subr.bf16.mxu0 %v914
    %1160 = vmatpush1.bf16.msra.mxu0 %v913
    %1161 = vmatprep.subr.bf16.mxu0 %v910
    %1162 = vmatpush1.bf16.msra.mxu0 %v909
    %1163 = vmatprep.subr.bf16.mxu0 %v906
    %1164 = vmatpush1.bf16.msra.mxu0 %v905
    %1165 = vmatprep.subr.bf16.mxu0 %v902
    %1166 = vmatpush1.bf16.msra.mxu0 %v901
    %1167 = vmatprep.subr.bf16.mxu0 %v898
    %1168 = vmatpush1.bf16.msra.mxu0 %v897
    %1169 = vmatprep.subr.bf16.mxu0 %v958
    %1170 = vmatpush2.bf16.msra.mxu0 %v957
    %1171 = vmatprep.subr.bf16.mxu0 %v954
    %1172 = vmatpush2.bf16.msra.mxu0 %v953
    %1173 = vmatprep.subr.bf16.mxu0 %v950
    %1174 = vmatpush2.bf16.msra.mxu0 %v949
    %1175 = vmatprep.subr.bf16.mxu0 %v946
    %1176 = vmatpush2.bf16.msra.mxu0 %v945
    %1177 = vmatprep.subr.bf16.mxu0 %v942
    %1178 = vmatpush2.bf16.msra.mxu0 %v941
    %1179 = vmatprep.subr.bf16.mxu0 %v938
    %1180 = vmatpush2.bf16.msra.mxu0 %v937
    %1181 = vmatprep.subr.bf16.mxu0 %v934
    %1182 = vmatpush2.bf16.msra.mxu0 %v933
    %1183 = vmatprep.subr.bf16.mxu0 %v930
    %1184 = vmatpush2.bf16.msra.mxu0 %v929
    %1185 = vmatprep.mubr.bf16.mxu0 %v506
    %1186 = vmatmul.mubr.bf16.gmra.mxu0 %v505
    %v1187 = vpop.f32.mrf.mxu0
    %v1188 = vadd.f32 %v482, %v1187
    %v1189 = vpop.f32.mrf.mxu0
    %v1190 = vadd.f32 %v486, %v1189
    %v1191 = vpop.f32.mrf.mxu0
    %v1192 = vpop.f32.mrf.mxu0
    %1193 = vdwg.mxu0
    %1194 = vmatprep.subr.bf16.mxu0 %v990
    %1195 = vmatpush1.bf16.msra.mxu0 %v989
    %1196 = vmatprep.subr.bf16.mxu0 %v986
    %1197 = vmatpush1.bf16.msra.mxu0 %v985
    %1198 = vmatprep.subr.bf16.mxu0 %v982
    %1199 = vmatpush1.bf16.msra.mxu0 %v981
    %1200 = vmatprep.subr.bf16.mxu0 %v978
    %1201 = vmatpush1.bf16.msra.mxu0 %v977
    %1202 = vmatprep.subr.bf16.mxu0 %v974
    %1203 = vmatpush1.bf16.msra.mxu0 %v973
    %1204 = vmatprep.subr.bf16.mxu0 %v970
    %1205 = vmatpush1.bf16.msra.mxu0 %v969
    %1206 = vmatprep.subr.bf16.mxu0 %v966
    %1207 = vmatpush1.bf16.msra.mxu0 %v965
    %1208 = vmatprep.subr.bf16.mxu0 %v962
    %1209 = vmatpush1.bf16.msra.mxu0 %v961
    %1210 = vmatprep.subr.bf16.mxu0 %v1022
    %1211 = vmatpush2.bf16.msra.mxu0 %v1021
    %1212 = vmatprep.subr.bf16.mxu0 %v1018
    %1213 = vmatpush2.bf16.msra.mxu0 %v1017
    %1214 = vmatprep.subr.bf16.mxu0 %v1014
    %1215 = vmatpush2.bf16.msra.mxu0 %v1013
    %1216 = vmatprep.subr.bf16.mxu0 %v1010
    %1217 = vmatpush2.bf16.msra.mxu0 %v1009
    %1218 = vmatprep.subr.bf16.mxu0 %v1006
    %1219 = vmatpush2.bf16.msra.mxu0 %v1005
    %1220 = vmatprep.subr.bf16.mxu0 %v1002
    %1221 = vmatpush2.bf16.msra.mxu0 %v1001
    %1222 = vmatprep.subr.bf16.mxu0 %v998
    %1223 = vmatpush2.bf16.msra.mxu0 %v997
    %1224 = vmatprep.subr.bf16.mxu0 %v994
    %1225 = vmatpush2.bf16.msra.mxu0 %v993
    %1226 = vmatprep.mubr.bf16.mxu0 %v508
    %1227 = vmatmul.mubr.bf16.gmra.mxu0 %v507
    %v1228 = vpop.f32.mrf.mxu0
    %v1229 = vadd.f32 %v1188, %v1228
    %v1230 = vpop.f32.mrf.mxu0
    %v1231 = vadd.f32 %v1190, %v1230
    %v1232 = vpop.f32.mrf.mxu0
    %v1233 = vpop.f32.mrf.mxu0
    %1234 = vdwg.mxu0
    %1235 = vmatprep.subr.bf16.mxu0 %v928
    %1236 = vmatpush1.bf16.msra.mxu0 %v927
    %1237 = vmatprep.subr.bf16.mxu0 %v924
    %1238 = vmatpush1.bf16.msra.mxu0 %v923
    %1239 = vmatprep.subr.bf16.mxu0 %v920
    %1240 = vmatpush1.bf16.msra.mxu0 %v919
    %1241 = vmatprep.subr.bf16.mxu0 %v916
    %1242 = vmatpush1.bf16.msra.mxu0 %v915
    %1243 = vmatprep.subr.bf16.mxu0 %v912
    %1244 = vmatpush1.bf16.msra.mxu0 %v911
    %1245 = vmatprep.subr.bf16.mxu0 %v908
    %1246 = vmatpush1.bf16.msra.mxu0 %v907
    %1247 = vmatprep.subr.bf16.mxu0 %v904
    %1248 = vmatpush1.bf16.msra.mxu0 %v903
    %1249 = vmatprep.subr.bf16.mxu0 %v900
    %1250 = vmatpush1.bf16.msra.mxu0 %v899
    %1251 = vmatprep.subr.bf16.mxu0 %v960
    %1252 = vmatpush2.bf16.msra.mxu0 %v959
    %1253 = vmatprep.subr.bf16.mxu0 %v956
    %1254 = vmatpush2.bf16.msra.mxu0 %v955
    %1255 = vmatprep.subr.bf16.mxu0 %v952
    %1256 = vmatpush2.bf16.msra.mxu0 %v951
    %1257 = vmatprep.subr.bf16.mxu0 %v948
    %1258 = vmatpush2.bf16.msra.mxu0 %v947
    %1259 = vmatprep.subr.bf16.mxu0 %v944
    %1260 = vmatpush2.bf16.msra.mxu0 %v943
    %1261 = vmatprep.subr.bf16.mxu0 %v940
    %1262 = vmatpush2.bf16.msra.mxu0 %v939
    %1263 = vmatprep.subr.bf16.mxu0 %v936
    %1264 = vmatpush2.bf16.msra.mxu0 %v935
    %1265 = vmatprep.subr.bf16.mxu0 %v932
    %1266 = vmatpush2.bf16.msra.mxu0 %v931
    %1267 = vmatprep.mubr.bf16.mxu0 %v506
    %1268 = vmatmul.mubr.bf16.gmra.mxu0 %v505
    %v1269 = vpop.f32.mrf.mxu0
    %v1270 = vadd.f32 %v490, %v1269
    %v1271 = vpop.f32.mrf.mxu0
    %v1272 = vadd.f32 %v494, %v1271
    %v1273 = vpop.f32.mrf.mxu0
    %v1274 = vpop.f32.mrf.mxu0
    %1275 = vdwg.mxu0
    %1276 = vmatprep.subr.bf16.mxu0 %v992
    %1277 = vmatpush1.bf16.msra.mxu0 %v991
    %1278 = vmatprep.subr.bf16.mxu0 %v988
    %1279 = vmatpush1.bf16.msra.mxu0 %v987
    %1280 = vmatprep.subr.bf16.mxu0 %v984
    %1281 = vmatpush1.bf16.msra.mxu0 %v983
    %1282 = vmatprep.subr.bf16.mxu0 %v980
    %1283 = vmatpush1.bf16.msra.mxu0 %v979
    %1284 = vmatprep.subr.bf16.mxu0 %v976
    %1285 = vmatpush1.bf16.msra.mxu0 %v975
    %1286 = vmatprep.subr.bf16.mxu0 %v972
    %1287 = vmatpush1.bf16.msra.mxu0 %v971
    %1288 = vmatprep.subr.bf16.mxu0 %v968
    %1289 = vmatpush1.bf16.msra.mxu0 %v967
    %1290 = vmatprep.subr.bf16.mxu0 %v964
    %1291 = vmatpush1.bf16.msra.mxu0 %v963
    %1292 = vmatprep.subr.bf16.mxu0 %v1024
    %1293 = vmatpush2.bf16.msra.mxu0 %v1023
    %1294 = vmatprep.subr.bf16.mxu0 %v1020
    %1295 = vmatpush2.bf16.msra.mxu0 %v1019
    %1296 = vmatprep.subr.bf16.mxu0 %v1016
    %1297 = vmatpush2.bf16.msra.mxu0 %v1015
    %1298 = vmatprep.subr.bf16.mxu0 %v1012
    %1299 = vmatpush2.bf16.msra.mxu0 %v1011
    %1300 = vmatprep.subr.bf16.mxu0 %v1008
    %1301 = vmatpush2.bf16.msra.mxu0 %v1007
    %1302 = vmatprep.subr.bf16.mxu0 %v1004
    %1303 = vmatpush2.bf16.msra.mxu0 %v1003
    %1304 = vmatprep.subr.bf16.mxu0 %v1000
    %1305 = vmatpush2.bf16.msra.mxu0 %v999
    %1306 = vmatprep.subr.bf16.mxu0 %v996
    %1307 = vmatpush2.bf16.msra.mxu0 %v995
    %1308 = vmatprep.mubr.bf16.mxu0 %v508
    %1309 = vmatmul.mubr.bf16.gmra.mxu0 %v507
    %v1310 = vpop.f32.mrf.mxu0
    %v1311 = vadd.f32 %v1270, %v1310
    %v1312 = vpop.f32.mrf.mxu0
    %v1313 = vadd.f32 %v1272, %v1312
    %v1314 = vpop.f32.mrf.mxu0
    %v1315 = vpop.f32.mrf.mxu0
    %1316 = vdwg.mxu0
    %v1317 = vmax.f32 %v1229, 0.0
    %v1318 = vmax.f32 %v1231, 0.0
    %v1319 = vmax.f32 %v1311, 0.0
    %v1320 = vmax.f32 %v1313, 0.0
    %v1321 = vpack.c.bf16 %v1317, %v1317
    %v1322 = vpack.c.bf16 %v1318, %v1318
    %v1323 = vpack.c.bf16 %v1319, %v1319
    %v1324 = vpack.c.bf16 %v1320, %v1320
    %v1329 = vunpack.c.l.b16 %v1321
    %v1330 = vunpack.c.l.b16 %v1322
    %v1331 = vunpack.c.l.b16 %v1323
    %v1332 = vunpack.c.l.b16 %v1324
    %v1333 = vpack.c.b16 %v1330, %v1329
    %v1334 = vpack.c.b16 %v1332, %v1331
    %1337 = vst [vmem:[#allocation3] sm:$0xff] %v1333
    %1338 = vst [vmem:[#allocation3 + $0x8] sm:$0xff] %v1334
    %v1339 = vld [vmem:[#allocation3] sm:$0xff]
    %v1340 = vld [vmem:[#allocation3 + $0x8] sm:$0xff]
    %v1341 = vld [vmem:[%s5] sm:$0xf]
    %v1342 = vld [vmem:[%s5 + $0x4] sm:$0xf]
    %v1343 = vld [vmem:[%s5 + $0x8] sm:$0xf]
    %v1344 = vld [vmem:[%s5 + $0xc] sm:$0xf]
    %v1345 = vld [vmem:[%s5 + $0x10] sm:$0xf]
    %v1346 = vld [vmem:[%s5 + $0x14] sm:$0xf]
    %v1347 = vld [vmem:[%s5 + $0x18] sm:$0xf]
    %v1348 = vld [vmem:[%s5 + $0x1c] sm:$0xf]
    %v1349 = vld [vmem:[%s5 + $0x20] sm:$0xf]
    %v1350 = vld [vmem:[%s5 + $0x24] sm:$0xf]
    %v1351 = vld [vmem:[%s5 + $0x28] sm:$0xf]
    %v1352 = vld [vmem:[%s5 + $0x2c] sm:$0xf]
    %v1353 = vld [vmem:[%s5 + $0x30] sm:$0xf]
    %v1354 = vld [vmem:[%s5 + $0x34] sm:$0xf]
    %v1355 = vld [vmem:[%s5 + $0x38] sm:$0xf]
    %v1356 = vld [vmem:[%s5 + $0x3c] sm:$0xf]
    %v1357 = vld [vmem:[%s5 + $0x40] sm:$0xf]
    %v1358 = vld [vmem:[%s5 + $0x44] sm:$0xf]
    %v1359 = vld [vmem:[%s5 + $0x48] sm:$0xf]
    %v1360 = vld [vmem:[%s5 + $0x4c] sm:$0xf]
    %v1361 = vld [vmem:[%s5 + $0x50] sm:$0xf]
    %v1362 = vld [vmem:[%s5 + $0x54] sm:$0xf]
    %v1363 = vld [vmem:[%s5 + $0x58] sm:$0xf]
    %v1364 = vld [vmem:[%s5 + $0x5c] sm:$0xf]
    %v1365 = vld [vmem:[%s5 + $0x60] sm:$0xf]
    %v1366 = vld [vmem:[%s5 + $0x64] sm:$0xf]
    %v1367 = vld [vmem:[%s5 + $0x68] sm:$0xf]
    %v1368 = vld [vmem:[%s5 + $0x6c] sm:$0xf]
    %v1369 = vld [vmem:[%s5 + $0x70] sm:$0xf]
    %v1370 = vld [vmem:[%s5 + $0x74] sm:$0xf]
    %v1371 = vld [vmem:[%s5 + $0x78] sm:$0xf]
    %v1372 = vld [vmem:[%s5 + $0x7c] sm:$0xf]
    %v1373 = vld [vmem:[%s5 + $0x80] sm:$0xf]
    %v1374 = vld [vmem:[%s5 + $0x84] sm:$0xf]
    %v1375 = vld [vmem:[%s5 + $0x88] sm:$0xf]
    %v1376 = vld [vmem:[%s5 + $0x8c] sm:$0xf]
    %v1377 = vld [vmem:[%s5 + $0x90] sm:$0xf]
    %v1378 = vld [vmem:[%s5 + $0x94] sm:$0xf]
    %v1379 = vld [vmem:[%s5 + $0x98] sm:$0xf]
    %v1380 = vld [vmem:[%s5 + $0x9c] sm:$0xf]
    %v1381 = vld [vmem:[%s5 + $0xa0] sm:$0xf]
    %v1382 = vld [vmem:[%s5 + $0xa4] sm:$0xf]
    %v1383 = vld [vmem:[%s5 + $0xa8] sm:$0xf]
    %v1384 = vld [vmem:[%s5 + $0xac] sm:$0xf]
    %v1385 = vld [vmem:[%s5 + $0xb0] sm:$0xf]
    %v1386 = vld [vmem:[%s5 + $0xb4] sm:$0xf]
    %v1387 = vld [vmem:[%s5 + $0xb8] sm:$0xf]
    %v1388 = vld [vmem:[%s5 + $0xbc] sm:$0xf]
    %v1389 = vld [vmem:[%s5 + $0xc0] sm:$0xf]
    %v1390 = vld [vmem:[%s5 + $0xc4] sm:$0xf]
    %v1391 = vld [vmem:[%s5 + $0xc8] sm:$0xf]
    %v1392 = vld [vmem:[%s5 + $0xcc] sm:$0xf]
    %v1393 = vld [vmem:[%s5 + $0xd0] sm:$0xf]
    %v1394 = vld [vmem:[%s5 + $0xd4] sm:$0xf]
    %v1395 = vld [vmem:[%s5 + $0xd8] sm:$0xf]
    %v1396 = vld [vmem:[%s5 + $0xdc] sm:$0xf]
    %v1397 = vld [vmem:[%s5 + $0xe0] sm:$0xf]
    %v1398 = vld [vmem:[%s5 + $0xe4] sm:$0xf]
    %v1399 = vld [vmem:[%s5 + $0xe8] sm:$0xf]
    %v1400 = vld [vmem:[%s5 + $0xec] sm:$0xf]
    %v1401 = vld [vmem:[%s5 + $0xf0] sm:$0xf]
    %v1402 = vld [vmem:[%s5 + $0xf4] sm:$0xf]
    %v1403 = vld [vmem:[%s5 + $0xf8] sm:$0xf]
    %v1404 = vld [vmem:[%s5 + $0xfc] sm:$0xf]
    %v1405 = vld [vmem:[%s6] sm:$0x1]
    %v1407 = vlaneseq
    %v1408 = vshrl.u32 %v1407, 7
    %v1409 = vsub.s32 0, %v1408
    %v1410 = vrot.slane %v1405, %v1409
    %v1414 = vunpack.c.l.b16 %v1339
    %v1415 = vunpack.c.h.b16 %v1339
    %v1416 = vunpack.c.l.b16 %v1340
    %v1417 = vunpack.c.h.b16 %v1340
    %v1418 = vpack.c.b16 %v1414, %v1414
    %v1419 = vpack.c.b16 %v1415, %v1415
    %v1420 = vpack.c.b16 %v1416, %v1416
    %v1421 = vpack.c.b16 %v1417, %v1417
    %v1490 = vunpack.c.l.b16 %v1341
    %v1491 = vunpack.c.l.b16 %v1342
    %v1492 = vunpack.c.l.b16 %v1343
    %v1493 = vunpack.c.l.b16 %v1344
    %v1494 = vunpack.c.l.b16 %v1345
    %v1495 = vunpack.c.l.b16 %v1346
    %v1496 = vunpack.c.l.b16 %v1347
    %v1497 = vunpack.c.l.b16 %v1348
    %v1498 = vunpack.c.l.b16 %v1349
    %v1499 = vunpack.c.l.b16 %v1350
    %v1500 = vunpack.c.l.b16 %v1351
    %v1501 = vunpack.c.l.b16 %v1352
    %v1502 = vunpack.c.l.b16 %v1353
    %v1503 = vunpack.c.l.b16 %v1354
    %v1504 = vunpack.c.l.b16 %v1355
    %v1505 = vunpack.c.l.b16 %v1356
    %v1506 = vunpack.c.l.b16 %v1357
    %v1507 = vunpack.c.l.b16 %v1358
    %v1508 = vunpack.c.l.b16 %v1359
    %v1509 = vunpack.c.l.b16 %v1360
    %v1510 = vunpack.c.l.b16 %v1361
    %v1511 = vunpack.c.l.b16 %v1362
    %v1512 = vunpack.c.l.b16 %v1363
    %v1513 = vunpack.c.l.b16 %v1364
    %v1514 = vunpack.c.l.b16 %v1365
    %v1515 = vunpack.c.l.b16 %v1366
    %v1516 = vunpack.c.l.b16 %v1367
    %v1517 = vunpack.c.l.b16 %v1368
    %v1518 = vunpack.c.l.b16 %v1369
    %v1519 = vunpack.c.l.b16 %v1370
    %v1520 = vunpack.c.l.b16 %v1371
    %v1521 = vunpack.c.l.b16 %v1372
    %v1522 = vunpack.c.l.b16 %v1373
    %v1523 = vunpack.c.l.b16 %v1374
    %v1524 = vunpack.c.l.b16 %v1375
    %v1525 = vunpack.c.l.b16 %v1376
    %v1526 = vunpack.c.l.b16 %v1377
    %v1527 = vunpack.c.l.b16 %v1378
    %v1528 = vunpack.c.l.b16 %v1379
    %v1529 = vunpack.c.l.b16 %v1380
    %v1530 = vunpack.c.l.b16 %v1381
    %v1531 = vunpack.c.l.b16 %v1382
    %v1532 = vunpack.c.l.b16 %v1383
    %v1533 = vunpack.c.l.b16 %v1384
    %v1534 = vunpack.c.l.b16 %v1385
    %v1535 = vunpack.c.l.b16 %v1386
    %v1536 = vunpack.c.l.b16 %v1387
    %v1537 = vunpack.c.l.b16 %v1388
    %v1538 = vunpack.c.l.b16 %v1389
    %v1539 = vunpack.c.l.b16 %v1390
    %v1540 = vunpack.c.l.b16 %v1391
    %v1541 = vunpack.c.l.b16 %v1392
    %v1542 = vunpack.c.l.b16 %v1393
    %v1543 = vunpack.c.l.b16 %v1394
    %v1544 = vunpack.c.l.b16 %v1395
    %v1545 = vunpack.c.l.b16 %v1396
    %v1546 = vunpack.c.l.b16 %v1397
    %v1547 = vunpack.c.l.b16 %v1398
    %v1548 = vunpack.c.l.b16 %v1399
    %v1549 = vunpack.c.l.b16 %v1400
    %v1550 = vunpack.c.l.b16 %v1401
    %v1551 = vunpack.c.l.b16 %v1402
    %v1552 = vunpack.c.l.b16 %v1403
    %v1553 = vunpack.c.l.b16 %v1404
    %v1554 = vpack.c.b16 %v1491, %v1490
    %v1555 = vpack.c.b16 %v1493, %v1492
    %v1556 = vpack.c.b16 %v1495, %v1494
    %v1557 = vpack.c.b16 %v1497, %v1496
    %v1558 = vpack.c.b16 %v1499, %v1498
    %v1559 = vpack.c.b16 %v1501, %v1500
    %v1560 = vpack.c.b16 %v1503, %v1502
    %v1561 = vpack.c.b16 %v1505, %v1504
    %v1562 = vpack.c.b16 %v1507, %v1506
    %v1563 = vpack.c.b16 %v1509, %v1508
    %v1564 = vpack.c.b16 %v1511, %v1510
    %v1565 = vpack.c.b16 %v1513, %v1512
    %v1566 = vpack.c.b16 %v1515, %v1514
    %v1567 = vpack.c.b16 %v1517, %v1516
    %v1568 = vpack.c.b16 %v1519, %v1518
    %v1569 = vpack.c.b16 %v1521, %v1520
    %v1570 = vpack.c.b16 %v1523, %v1522
    %v1571 = vpack.c.b16 %v1525, %v1524
    %v1572 = vpack.c.b16 %v1527, %v1526
    %v1573 = vpack.c.b16 %v1529, %v1528
    %v1574 = vpack.c.b16 %v1531, %v1530
    %v1575 = vpack.c.b16 %v1533, %v1532
    %v1576 = vpack.c.b16 %v1535, %v1534
    %v1577 = vpack.c.b16 %v1537, %v1536
    %v1578 = vpack.c.b16 %v1539, %v1538
    %v1579 = vpack.c.b16 %v1541, %v1540
    %v1580 = vpack.c.b16 %v1543, %v1542
    %v1581 = vpack.c.b16 %v1545, %v1544
    %v1582 = vpack.c.b16 %v1547, %v1546
    %v1583 = vpack.c.b16 %v1549, %v1548
    %v1584 = vpack.c.b16 %v1551, %v1550
    %v1585 = vpack.c.b16 %v1553, %v1552
    %1618 = vmatprep.subr.bf16.mxu0 0
    %1619 = vmatpush1.bf16.msra.mxu0 %v1561
    %1620 = vmatprep.subr.bf16.mxu0 0
    %1621 = vmatpush1.bf16.msra.mxu0 %v1560
    %1622 = vmatprep.subr.bf16.mxu0 0
    %1623 = vmatpush1.bf16.msra.mxu0 %v1559
    %1624 = vmatprep.subr.bf16.mxu0 0
    %1625 = vmatpush1.bf16.msra.mxu0 %v1558
    %1626 = vmatprep.subr.bf16.mxu0 0
    %1627 = vmatpush1.bf16.msra.mxu0 %v1557
    %1628 = vmatprep.subr.bf16.mxu0 0
    %1629 = vmatpush1.bf16.msra.mxu0 %v1556
    %1630 = vmatprep.subr.bf16.mxu0 0
    %1631 = vmatpush1.bf16.msra.mxu0 %v1555
    %1632 = vmatprep.subr.bf16.mxu0 0
    %1633 = vmatpush1.bf16.msra.mxu0 %v1554
    %1634 = vmatprep.subr.bf16.mxu0 0
    %1635 = vmatpush2.bf16.msra.mxu0 %v1569
    %1636 = vmatprep.subr.bf16.mxu0 0
    %1637 = vmatpush2.bf16.msra.mxu0 %v1568
    %1638 = vmatprep.subr.bf16.mxu0 0
    %1639 = vmatpush2.bf16.msra.mxu0 %v1567
    %1640 = vmatprep.subr.bf16.mxu0 0
    %1641 = vmatpush2.bf16.msra.mxu0 %v1566
    %1642 = vmatprep.subr.bf16.mxu0 0
    %1643 = vmatpush2.bf16.msra.mxu0 %v1565
    %1644 = vmatprep.subr.bf16.mxu0 0
    %1645 = vmatpush2.bf16.msra.mxu0 %v1564
    %1646 = vmatprep.subr.bf16.mxu0 0
    %1647 = vmatpush2.bf16.msra.mxu0 %v1563
    %1648 = vmatprep.subr.bf16.mxu0 0
    %1649 = vmatpush2.bf16.msra.mxu0 %v1562
    %1650 = vmatprep.mubr.bf16.mxu0 %v1419
    %1651 = vmatmul.mubr.bf16.gmra.mxu0 %v1418
    %v1652 = vpop.f32.mrf.mxu0
    %v1653 = vadd.f32 %v1410, %v1652
    %v1654 = vpop.f32.mrf.mxu0
    %v1655 = vpop.f32.mrf.mxu0
    %v1656 = vpop.f32.mrf.mxu0
    %1657 = vdwg.mxu0
    %1658 = vmatprep.subr.bf16.mxu0 0
    %1659 = vmatpush1.bf16.msra.mxu0 %v1577
    %1660 = vmatprep.subr.bf16.mxu0 0
    %1661 = vmatpush1.bf16.msra.mxu0 %v1576
    %1662 = vmatprep.subr.bf16.mxu0 0
    %1663 = vmatpush1.bf16.msra.mxu0 %v1575
    %1664 = vmatprep.subr.bf16.mxu0 0
    %1665 = vmatpush1.bf16.msra.mxu0 %v1574
    %1666 = vmatprep.subr.bf16.mxu0 0
    %1667 = vmatpush1.bf16.msra.mxu0 %v1573
    %1668 = vmatprep.subr.bf16.mxu0 0
    %1669 = vmatpush1.bf16.msra.mxu0 %v1572
    %1670 = vmatprep.subr.bf16.mxu0 0
    %1671 = vmatpush1.bf16.msra.mxu0 %v1571
    %1672 = vmatprep.subr.bf16.mxu0 0
    %1673 = vmatpush1.bf16.msra.mxu0 %v1570
    %1674 = vmatprep.subr.bf16.mxu0 0
    %1675 = vmatpush2.bf16.msra.mxu0 %v1585
    %1676 = vmatprep.subr.bf16.mxu0 0
    %1677 = vmatpush2.bf16.msra.mxu0 %v1584
    %1678 = vmatprep.subr.bf16.mxu0 0
    %1679 = vmatpush2.bf16.msra.mxu0 %v1583
    %1680 = vmatprep.subr.bf16.mxu0 0
    %1681 = vmatpush2.bf16.msra.mxu0 %v1582
    %1682 = vmatprep.subr.bf16.mxu0 0
    %1683 = vmatpush2.bf16.msra.mxu0 %v1581
    %1684 = vmatprep.subr.bf16.mxu0 0
    %1685 = vmatpush2.bf16.msra.mxu0 %v1580
    %1686 = vmatprep.subr.bf16.mxu0 0
    %1687 = vmatpush2.bf16.msra.mxu0 %v1579
    %1688 = vmatprep.subr.bf16.mxu0 0
    %1689 = vmatpush2.bf16.msra.mxu0 %v1578
    %1690 = vmatprep.mubr.bf16.mxu0 %v1421
    %1691 = vmatmul.mubr.bf16.gmra.mxu0 %v1420
    %v1692 = vpop.f32.mrf.mxu0
    %v1693 = vadd.f32 %v1653, %v1692
    %v1694 = vpop.f32.mrf.mxu0
    %v1695 = vpop.f32.mrf.mxu0
    %v1696 = vpop.f32.mrf.mxu0
    %1697 = vdwg.mxu0
    %1698 = vst [vmem:[#allocation4] sm:$0xff] %v1693
    // Predicated region
    $region30: #{neural_network1_forward.1} parent=1 // pred_check
      _
    $region31: #{neural_network1_forward.1} parent=1 // pred_check_branch
      %1700 = sbr.rel (0) target = $region33
    $region32: #{neural_network1_forward.1} parent=1 // pred_region
      %s1702 = ssub.s32 128, 128
      %1703 = vsyncadd [#allocation5], %s1702
      %s1705 = sshll.u32 [#allocation4], 4
      %s1706 = int_to_ptr.vmem [resolvable:$true] %s1705
      %1708 = dma.vmem_to_hbm [thread:$0]  %s1706, 128, %s7, [#allocation5]
    $region33: #{neural_network1_forward.1} parent=1 // pred_fallthru
      _
    // Predicated region
    $region34: #{neural_network1_forward.1} parent=1 // pred_check
      _
    $region35: #{neural_network1_forward.1} parent=1 // pred_check_branch
      %1710 = sbr.rel (0) target = $region37
    $region36: #{neural_network1_forward.1} parent=1 // pred_region
      %1711 = dma.done [#allocation5], 128
    $region37: #{neural_network1_forward.1} parent=1 // pred_fallthru
      _
    %1712 = vsyncpa [#allocation5], 1

</llo_original>
